<compile_context>
chip_gen: v5e
topology: v5e:2x2
jax: 0.10.0
libtpu: 0.0.40
codegen_flags: <defaults>
</compile_context>

<pallas_src>
import functools

import jax
import jax.numpy as jnp
from jax.experimental import pallas as pl
from jax.experimental.pallas import tpu as pltpu


# ----------------------------- kernels ---------------------------------------


def _rope_kernel_perhead(cos_ref, sin_ref, x_ref, o_ref):
    """Per-head roll path for lane-dense head dims (D % 128 == 0).

    x_ref / o_ref : (tT, H, D)   (batch dim squeezed by the BlockSpec)
    cos_ref       : (tT, D)  f32, contents [cos, cos]
    sin_ref       : (tT, D)  f32, contents [sin, -sin]
    """
    x = x_ref[...]                                    # keep input dtype
    d = x.shape[-1]
    partner = pltpu.roll(x, shift=d // 2, axis=2)     # swap halves within each head (XLU)
    cos = cos_ref[...][:, None, :]                    # (tT, 1, D), broadcast over heads
    sin = sin_ref[...][:, None, :]
    # TODO(synk): on v7x with bf16 inputs a bf16-table path would halve VALU work; kept f32
    # tables so the multiply-add accumulates in f32 before the single cast back.
    o_ref[...] = (x * cos + partner * sin).astype(o_ref.dtype)


def _rope_kernel_flat(cos_ref, sin_ref, x_ref, o_ref, *, d, dh):
    """Flattened lane-dense path for D % 128 != 0 (the common head_dim = 32/64 case).

    x_ref / o_ref : (tT, H*D)    -- heads flattened into the lane axis
    cos_ref       : (tT, H*D) f32, per head [cos, cos]
    sin_ref       : (tT, H*D) f32, per head [sin, -sin]

    The rotation partner (the other half of the same head) is built with two lane rotates
    (XLU slot — slack in this mem-bound kernel) and one select; the result is written as a
    single full-width unmasked store.
    """
    x = x_ref[...]
    hd = x.shape[-1]
    fwd = pltpu.roll(x, shift=dh, axis=1)         # out[i] = x[i - dh]  (valid at 2nd halves)
    bwd = pltpu.roll(x, shift=hd - dh, axis=1)    # out[i] = x[i + dh]  (valid at 1st halves)
    lane = jax.lax.broadcasted_iota(jnp.int32, x.shape, 1)
    first_half = (lane % d) < dh
    partner = jnp.where(first_half, bwd, fwd)
    # f32 tables promote the multiply-add to f32; one cast back, one unmasked store.
    o_ref[...] = (x * cos_ref[...] + partner * sin_ref[...]).astype(o_ref.dtype)


# ----------------------------- wrapper ----------------------------------------


def _vmem_plan():
    """Per-generation VMEM plan: (tile planning budget, scoped vmem limit), in bytes."""
    cap = 64 << 20                                    # conservative fallback (v7x per-core)
    try:
        cap = int(pltpu.get_tpu_info().vmem_capacity_bytes)
    except Exception:
        pass
    vmem_limit = (cap * 3) // 4                       # ~96 MiB on v5e/v6e, ~48 MiB on v7x
    tile_budget = (cap * 11) // 20                    # ~55%: headroom for compiler scratch
    return tile_budget, vmem_limit


def _pick_seq_tile(T, B, HD, tab_w, itemsize, budget_bytes, min_grid=2):
    """Largest seq tile tT that divides T, satisfies the (8,128) rule for the (tT, tab_w)
    table blocks (tT % 8 == 0 or tT == T), keeps double-buffered blocks under the VMEM
    budget, and — when possible — leaves >= min_grid total grid iterations so both v7x
    TensorCores have work."""

    def tile_bytes(t):
        io = 2 * 2 * t * HD * itemsize                # x in + out, double-buffered
        tab = 2 * 2 * t * tab_w * 4                   # cos/sin table blocks, double-buffered
        tmp = 2 * t * HD * 4                          # f32 intermediates (partner + result)
        return io + tab + tmp

    candidates = [t for t in range(1, T + 1)
                  if T % t == 0 and (t == T or t % 8 == 0)]
    fitting = [t for t in candidates if tile_bytes(t) <= budget_bytes]
    if not fitting:
        fitting = [min(candidates)]
    multi = [t for t in fitting if B * (T // t) >= min_grid]
    return max(multi) if multi else max(fitting)


def rotary_embedding(x, inv_freq):
    """x: (B, T, H, D); inv_freq: (D//2,).  Returns same shape/dtype as x."""
    B, T, H, D = x.shape
    Dh = D // 2
    HD = H * D
    assert inv_freq.shape == (Dh,), "rotary dim must equal head_dim (inv_freq has D/2 entries)"

    # Precompute the per-position tables once, in plain JAX (tiny, O(T*D) or O(T*H*D) f32).
    t = jnp.arange(T, dtype=jnp.float32)
    freqs = jnp.outer(t, inv_freq.astype(jnp.float32))      # (T, Dh)
    cos = jnp.cos(freqs)
    sin = jnp.sin(freqs)

    per_head_roll = (D % 128 == 0)
    if per_head_roll:
        # Head dim is already lane-dense: keep (B, T, H, D) blocks and narrow (T, D) tables.
        cos_tab = jnp.concatenate([cos, cos], axis=-1)                    # (T, D)
        sin_tab = jnp.concatenate([sin, -sin], axis=-1)
        x_in = x
        kernel = _rope_kernel_perhead
    else:
        # Flatten heads into the lane axis (free contiguous reshape) and pre-tile the tables
        # per head so the kernel needs no broadcast and stores are lane-dense.
        cos_tab = jnp.tile(jnp.concatenate([cos, cos], axis=-1), (1, H))  # (T, H*D)
        sin_tab = jnp.tile(jnp.concatenate([sin, -sin], axis=-1), (1, H))
        x_in = x.reshape(B, T, HD)
        kernel = functools.partial(_rope_kernel_flat, d=D, dh=Dh)
    tab_w = cos_tab.shape[-1]

    itemsize = jnp.dtype(x.dtype).itemsize
    tile_budget, vmem_limit = _vmem_plan()
    tT = _pick_seq_tile(T, B, HD, tab_w, itemsize, tile_budget)
    nT = T // tT

    if per_head_roll:
        data_block = (None, tT, H, D)
        data_map = lambda s, b: (b, s, 0, 0)
    else:
        data_block = (None, tT, HD)
        data_map = lambda s, b: (b, s, 0)

    # Tables are fetched once total: b is the innermost grid axis and their block index
    # ignores b, so Pallas skips the redundant DMAs across the batch loop.
    cost = pl.CostEstimate(
        flops=6 * B * T * HD,
        transcendentals=0,
        bytes_accessed=2 * B * T * HD * itemsize + 2 * T * tab_w * 4,
    )

    # TODO(synk): if a profile shows exposed DMA at large tT, bump the x/out BlockSpecs to
    # pipeline_mode=pl.Buffered(3).
    out = pl.pallas_call(
        kernel,
        out_shape=jax.ShapeDtypeStruct(x_in.shape, x.dtype),
        grid_spec=pltpu.PrefetchScalarGridSpec(
            num_scalar_prefetch=0,
            grid=(nT, B),                      # batch innermost -> table blocks stay resident
            in_specs=[
                pl.BlockSpec((tT, tab_w), lambda s, b: (s, 0)),   # cos table
                pl.BlockSpec((tT, tab_w), lambda s, b: (s, 0)),   # sin table
                pl.BlockSpec(data_block, data_map),               # x (batch squeezed)
            ],
            out_specs=pl.BlockSpec(data_block, data_map),
        ),
        compiler_params=pltpu.CompilerParams(
            dimension_semantics=("parallel", "parallel"),
            vmem_limit_bytes=int(vmem_limit),
        ),
        cost_estimate=cost,
    )(cos_tab, sin_tab, x_in)
    return out.reshape(B, T, H, D)


# ----------------------------- reference --------------------------------------


def rotary_embedding_ref(x, inv_freq):
    """Pure-JAX reference mirroring the PyTorch module exactly."""
    T = x.shape[1]
    t = jnp.arange(T, dtype=jnp.float32)
    freqs = jnp.outer(t, inv_freq)                          # (T, D//2)
    cos = jnp.cos(freqs)[None, :, None, :]
    sin = jnp.sin(freqs)[None, :, None, :]
    Dh = x.shape[3] // 2
    x1, x2 = x[..., :Dh], x[..., Dh:]
    y1 = x1 * cos + x2 * sin
    y2 = x1 * -sin + x2 * cos
    return jnp.concatenate([y1, y2], axis=3).astype(x.dtype)


if __name__ == "__main__":
    base = 10000.0

    # Case 1: nanoGPT-scale small shape (D = 32 < 128 -> flattened lane-dense path, H*D = 128).
    dim = 32
    inv_freq = (1.0 / base) ** (jnp.arange(0, dim, 2, dtype=jnp.float32) / dim)   # (D//2,)
    x = jax.random.normal(jax.random.PRNGKey(0), (2, 8, 4, dim), dtype=jnp.float32)

    out = jax.block_until_ready(rotary_embedding(x, inv_freq))
    ref = rotary_embedding_ref(x, inv_freq)
    assert out.shape == x.shape and out.dtype == x.dtype
    assert jnp.allclose(out, ref, atol=1e-5, rtol=1e-5)

    # Case 2: lane-dense head dim (D = 128 -> per-head roll path, single unmasked store).
    dim2 = 128
    inv_freq2 = (1.0 / base) ** (jnp.arange(0, dim2, 2, dtype=jnp.float32) / dim2)
    x2 = jax.random.normal(jax.random.PRNGKey(0), (1, 16, 2, dim2), dtype=jnp.float32)

    out2 = jax.block_until_ready(rotary_embedding(x2, inv_freq2))
    ref2 = rotary_embedding_ref(x2, inv_freq2)
    assert out2.shape == x2.shape and out2.dtype == x2.dtype
    assert jnp.allclose(out2, ref2, atol=1e-5, rtol=1e-5)

    print("KERNEL_OK")
</pallas_src>

<mosaic_0001>
module attributes {stable_mosaic.version = 11 : i64} {
  func.func @_rope_kernel_flat(%arg0: i32, %arg1: i32, %arg2: memref<8x128xf32, #tpu.memory_space<vmem>>, %arg3: memref<8x128xf32, #tpu.memory_space<vmem>>, %arg4: memref<1x8x128xf32, #tpu.memory_space<vmem>>, %arg5: memref<1x8x128xf32, #tpu.memory_space<vmem>>) attributes {dimension_semantics = [#tpu.dimension_semantics<parallel>, #tpu.dimension_semantics<parallel>], iteration_bounds = array<i64: 1, 2>, scalar_prefetch = 0 : i64, scratch_operands = 0 : i64, tpu.core_type = #tpu.core_type<tc>, window_params = [{transform_indices = @transform_0, window_bounds = array<i64: 8, 128>}, {transform_indices = @transform_1, window_bounds = array<i64: 8, 128>}, {transform_indices = @transform_2, window_bounds = array<i64: 1, 8, 128>}, {transform_indices = @transform_3, window_bounds = array<i64: 1, 8, 128>}]} {
    %c0 = arith.constant 0 : index
    %c0_0 = arith.constant 0 : index
    %c0_1 = arith.constant 0 : index
    %0 = vector.load %arg4[%c0, %c0_0, %c0_1] : memref<1x8x128xf32, #tpu.memory_space<vmem>>, vector<1x8x128xf32>
    %1 = vector.shape_cast %0 : vector<1x8x128xf32> to vector<8x128xf32>
    %c16_i32 = arith.constant 16 : i32
    %2 = tpu.dynamic_rotate %1 by %c16_i32 dim 1 : vector<8x128xf32>, i32 -> vector<8x128xf32>
    %c112_i32 = arith.constant 112 : i32
    %3 = tpu.dynamic_rotate %1 by %c112_i32 dim 1 : vector<8x128xf32>, i32 -> vector<8x128xf32>
    %4 = tpu.iota {dimensions = array<i32: 1>} : vector<8x128xi32>
    %c32_i32 = arith.constant 32 : i32
    %c0_i32 = arith.constant 0 : i32
    %5 = arith.cmpi eq, %c32_i32, %c0_i32 : i32
    %c1_i32 = arith.constant 1 : i32
    %6 = arith.select %5, %c1_i32, %c32_i32 : i32
    %7 = vector.broadcast %6 : i32 to vector<8x128xi32>
    %8 = arith.remsi %4, %7 : vector<8x128xi32>
    %c0_i32_2 = arith.constant 0 : i32
    %9 = vector.broadcast %c0_i32_2 : i32 to vector<8x128xi32>
    %10 = arith.cmpi ne, %8, %9 : vector<8x128xi32>
    %c0_i32_3 = arith.constant 0 : i32
    %11 = vector.broadcast %c0_i32_3 : i32 to vector<8x128xi32>
    %12 = arith.cmpi slt, %8, %11 : vector<8x128xi32>
    %c0_i32_4 = arith.constant 0 : i32
    %13 = arith.cmpi slt, %6, %c0_i32_4 : i32
    %14 = vector.broadcast %13 : i1 to vector<8x128xi1>
    %15 = vector.broadcast %14 : vector<8x128xi1> to vector<8x128xi1>
    %16 = arith.xori %12, %15 : vector<8x128xi1>
    %17 = arith.andi %16, %10 : vector<8x128xi1>
    %18 = vector.broadcast %6 : i32 to vector<8x128xi32>
    %19 = arith.addi %8, %18 : vector<8x128xi32>
    %20 = arith.select %17, %19, %8 : vector<8x128xi1>, vector<8x128xi32>
    %c16_i32_5 = arith.constant 16 : i32
    %21 = vector.broadcast %c16_i32_5 : i32 to vector<8x128xi32>
    %22 = arith.cmpi slt, %20, %21 : vector<8x128xi32>
    %23 = arith.select %22, %3, %2 : vector<8x128xi1>, vector<8x128xf32>
    %c0_6 = arith.constant 0 : index
    %c0_7 = arith.constant 0 : index
    %24 = vector.load %arg2[%c0_6, %c0_7] : memref<8x128xf32, #tpu.memory_space<vmem>>, vector<8x128xf32>
    %25 = arith.mulf %1, %24 : vector<8x128xf32>
    %c0_8 = arith.constant 0 : index
    %c0_9 = arith.constant 0 : index
    %26 = vector.load %arg3[%c0_8, %c0_9] : memref<8x128xf32, #tpu.memory_space<vmem>>, vector<8x128xf32>
    %27 = arith.mulf %23, %26 : vector<8x128xf32>
    %28 = arith.addf %25, %27 : vector<8x128xf32>
    %c0_10 = arith.constant 0 : index
    %c0_11 = arith.constant 0 : index
    %c0_12 = arith.constant 0 : index
    %29 = vector.load %arg5[%c0_10, %c0_11, %c0_12] : memref<1x8x128xf32, #tpu.memory_space<vmem>>, vector<1x8x128xf32>
    %30 = vector.shape_cast %29 : vector<1x8x128xf32> to vector<8x128xf32>
    %31 = vector.shape_cast %28 : vector<8x128xf32> to vector<1x8x128xf32>
    tpu.vector_store %arg5[%c0_10, %c0_11, %c0_12], %31 {strides = array<i32>} : memref<1x8x128xf32, #tpu.memory_space<vmem>>, vector<1x8x128xf32>,
    return
  }
  func.func @transform_0(%arg0: i32, %arg1: i32) -> (i32, i32) {
    %c0_i32 = arith.constant 0 : i32
    %c0_i32_0 = arith.constant 0 : i32
    return %arg0, %c0_i32 : i32, i32
  }
  func.func @transform_1(%arg0: i32, %arg1: i32) -> (i32, i32) {
    %c0_i32 = arith.constant 0 : i32
    %c0_i32_0 = arith.constant 0 : i32
    return %arg0, %c0_i32 : i32, i32
  }
  func.func @transform_2(%arg0: i32, %arg1: i32) -> (i32, i32, i32) {
    %c0_i32 = arith.constant 0 : i32
    %c0_i32_0 = arith.constant 0 : i32
    return %arg1, %arg0, %c0_i32 : i32, i32, i32
  }
  func.func @transform_3(%arg0: i32, %arg1: i32) -> (i32, i32, i32) {
    %c0_i32 = arith.constant 0 : i32
    %c0_i32_0 = arith.constant 0 : i32
    return %arg1, %arg0, %c0_i32 : i32, i32, i32
  }
}

</mosaic_0001>

<llo_original>
// kernel: tpu_custom_call.1
$region0: #{tpu_custom_call.1}
  #allocation0 [shape = 'u32[]', space=smem, size = 0x4, offset = 0x4, fixed_abs, tag = 'smem constant byte address 0x4 - core index']
  #allocation1 [shape = 'u32[72,128]{1,0:T(1,128)}', space=vmem, size = 0x9000, scoped, tag = 'internal scratch']
  %s0 = inlined_call_operand.hbm [shape: f32[8,128], index: 0, kind: input, shape index: {}]
  %s1 = inlined_call_operand.hbm [shape: f32[8,128], index: 1, kind: input, shape index: {}]
  %s2 = inlined_call_operand.hbm [shape: f32[2,8,128], index: 2, kind: input, shape index: {}]
  %s3 = inlined_call_operand.hbm [shape: f32[2,8,128], index: 3, kind: output, shape index: {}]
  %s4 = sld [smem:[#allocation0]]
  $region57: #{tpu_custom_call.1} parent=0
    _
  %s6 = ssub.s32 1, %s4
  %s7 = scalar_select 0, %s6, %s4
  $region1: #{tpu_custom_call.1} parent=0
    #allocation2 [shape = 'u8[4096]{0}', space=vmem, size = 0x1000, scoped, tag = 'input window, operand 0, single buffered']
    #allocation3 [shape = 's32[2]{0}', space=sflag, size = 0x8, scoped, tag = 'scoped memory for tpu_custom_call.1']
    #allocation4 [shape = 's32[2]{0}', space=sflag, size = 0x8, scoped, tag = 'scoped memory for tpu_custom_call.1']
    #allocation5 [shape = 'u8[4096]{0}', space=vmem, size = 0x1000, scoped, tag = 'input window, operand 1, single buffered']
    #allocation6 [shape = 's32[1]{0}', space=sflag, size = 0x4, scoped, tag = 'scoped memory for tpu_custom_call.1']
    #allocation7 [shape = 'u8[8192]{0}', space=vmem, size = 0x2000, scoped, tag = 'input window, operand 2']
    #allocation8 [shape = 'u8[8192]{0}', space=vmem, size = 0x2000, scoped, tag = 'output window, operand 0']
    %8 = vsyncpa [#allocation3], 0
    %9 = vsyncpa [#allocation6], 0
    %10 = vsyncpa [#allocation4], 0
    %s11 = scalar_lea.sflag [#allocation4], 1
    %12 = vsyncpa %s11, 0
    loop: start=0, step=1, limit=4
    $region2: #{tpu_custom_call.1} parent=1 // loop_pre_header
      _
    $region3: #{tpu_custom_call.1} parent=1 // loop_header
      %s14 = sphi 0, %s18
      %p15 = scmp.ge.s32.totalorder %s14, 4
      %s21 = sphi 0, %s33
      %s22 = sphi 0, %s29
      %s23 = sphi 0, %s21
      %s24 = sphi 0, %s22
      %s25 = sphi 0, %s23
      %s26 = sphi 0, %s24
      %s36 = sphi 0, %s38
      %s39 = sphi 0, %s36
      %s40 = sphi 0, %s39
      %s56 = sphi 0, %s40
      %s62 = sphi 0, %s64
      %s65 = sphi 0, %s62
      %s66 = sphi 0, %s65
      %s82 = sphi 0, %s66
      %s90 = sphi 0, %s92
      %s93 = sphi 0, %s90
      %s94 = sphi 0, %s93
      %s110 = sphi 0, %s94
      %s118 = sphi 0, %s120
      %s121 = sphi 0, %s118
      %s122 = sphi 0, %s121
      %s138 = sphi 0, %s122
    $region4: #{tpu_custom_call.1} parent=1 // loop_header_branch
      %17 = sbr.rel (%p15) target = $region8
    $region5: #{tpu_custom_call.1} parent=1 // loop_body
      %s19 = ssub.s32 %s14, 1
      %s20 = ssub.s32 %s14, 2
      %s27 = sadd.s32 1, %s22
      %p28 = scmp.ge.s32.totalorder %s27, 2
      %s29 = scalar_select %p28, 0, %s27
      %s30 = sadd.s32 1, %s21
      %s31 = scalar_select %p28, %s30, %s21
      %p32 = scmp.ge.s32.totalorder %s31, 1
      %s33 = scalar_select %p32, 0, %s31
      %s34 = ssub.s32 %s21, %s33
      %p35 = scmp.eq.s32.totalorder %s34, 0
      %s37 = sadd.s32 %s36, 1
      %s38 = scalar_select %p35, %s36, %s37
      %p41 = pneg %p35
      %p42 = scmp.eq.s32.totalorder %s14, 1
      %p43 = por %p41, %p42
      %p44 = scmp.ne.s32.totalorder %s36, %s39
      %p45 = scmp.eq.s32.totalorder %s14, 0
      %p46 = por %p44, %p45
      %p47 = scmp.ne.s32.totalorder %s36, %s39
      %p48 = scmp.eq.s32.totalorder %s19, 1
      %p49 = por %p47, %p48
      %p50 = scmp.ne.s32.totalorder %s39, %s40
      %p51 = scmp.eq.s32.totalorder %s19, 0
      %p52 = por %p50, %p51
      %p53 = scmp.ne.s32.totalorder %s39, %s40
      %p54 = scmp.eq.s32.totalorder %s20, 1
      %p55 = por %p53, %p54
      %p57 = scmp.ne.s32.totalorder %s40, %s56
      %p58 = scmp.eq.s32.totalorder %s20, 0
      %p59 = por %p57, %p58
      %s60 = ssub.s32 %s21, %s33
      %p61 = scmp.eq.s32.totalorder %s60, 0
      %s63 = sadd.s32 %s62, 1
      %s64 = scalar_select %p61, %s62, %s63
      %p67 = pneg %p61
      %p68 = scmp.eq.s32.totalorder %s14, 1
      %p69 = por %p67, %p68
      %p70 = scmp.ne.s32.totalorder %s62, %s65
      %p71 = scmp.eq.s32.totalorder %s14, 0
      %p72 = por %p70, %p71
      %p73 = scmp.ne.s32.totalorder %s62, %s65
      %p74 = scmp.eq.s32.totalorder %s19, 1
      %p75 = por %p73, %p74
      %p76 = scmp.ne.s32.totalorder %s65, %s66
      %p77 = scmp.eq.s32.totalorder %s19, 0
      %p78 = por %p76, %p77
      %p79 = scmp.ne.s32.totalorder %s65, %s66
      %p80 = scmp.eq.s32.totalorder %s20, 1
      %p81 = por %p79, %p80
      %p83 = scmp.ne.s32.totalorder %s66, %s82
      %p84 = scmp.eq.s32.totalorder %s20, 0
      %p85 = por %p83, %p84
      %s86 = ssub.s32 %s22, %s29
      %s87 = ssub.s32 %s21, %s33
      %s88 = sor.u32 %s86, %s87
      %p89 = scmp.eq.s32.totalorder %s88, 0
      %s91 = sadd.s32 %s90, 1
      %s92 = scalar_select %p89, %s90, %s91
      %p95 = pneg %p89
      %p96 = scmp.eq.s32.totalorder %s14, 1
      %p97 = por %p95, %p96
      %p98 = scmp.ne.s32.totalorder %s90, %s93
      %p99 = scmp.eq.s32.totalorder %s14, 0
      %p100 = por %p98, %p99
      %p101 = scmp.ne.s32.totalorder %s90, %s93
      %p102 = scmp.eq.s32.totalorder %s19, 1
      %p103 = por %p101, %p102
      %p104 = scmp.ne.s32.totalorder %s93, %s94
      %p105 = scmp.eq.s32.totalorder %s19, 0
      %p106 = por %p104, %p105
      %p107 = scmp.ne.s32.totalorder %s93, %s94
      %p108 = scmp.eq.s32.totalorder %s20, 1
      %p109 = por %p107, %p108
      %p111 = scmp.ne.s32.totalorder %s94, %s110
      %p112 = scmp.eq.s32.totalorder %s20, 0
      %p113 = por %p111, %p112
      %s114 = ssub.s32 %s22, %s29
      %s115 = ssub.s32 %s21, %s33
      %s116 = sor.u32 %s114, %s115
      %p117 = scmp.eq.s32.totalorder %s116, 0
      %s119 = sadd.s32 %s118, 1
      %s120 = scalar_select %p117, %s118, %s119
      %p123 = pneg %p117
      %p124 = scmp.eq.s32.totalorder %s14, 1
      %p125 = por %p123, %p124
      %p126 = scmp.ne.s32.totalorder %s118, %s121
      %p127 = scmp.eq.s32.totalorder %s14, 0
      %p128 = por %p126, %p127
      %p129 = scmp.ne.s32.totalorder %s118, %s121
      %p130 = scmp.eq.s32.totalorder %s19, 1
      %p131 = por %p129, %p130
      %p132 = scmp.ne.s32.totalorder %s121, %s122
      %p133 = scmp.eq.s32.totalorder %s19, 0
      %p134 = por %p132, %p133
      %p135 = scmp.ne.s32.totalorder %s121, %s122
      %p136 = scmp.eq.s32.totalorder %s20, 1
      %p137 = por %p135, %p136
      %p139 = scmp.ne.s32.totalorder %s122, %s138
      %p140 = scmp.eq.s32.totalorder %s20, 0
      %p141 = por %p139, %p140
      %p142 = scmp.le.s32.totalorder 1, %s14
      %p143 = scmp.lt.s32.totalorder %s14, 3
      %p144 = pnand %p142, %p143
      %p145 = pneg %p144
      // Predicated region
      $region9: #{tpu_custom_call.1} parent=5 // pred_check
        _
      $region10: #{tpu_custom_call.1} parent=5 // pred_check_branch
        %147 = sbr.rel (%p144) target = $region12
      $region11: #{tpu_custom_call.1} parent=5 // pred_region
        %s148 = ssub.s32 %s14, 1
        // Predicated region
        $region13: #{tpu_custom_call.1} parent=11 // pred_check
          %p149 = pneg %p52
        $region14: #{tpu_custom_call.1} parent=11 // pred_check_branch
          %151 = sbr.rel (%p149) target = $region16
        $region15: #{tpu_custom_call.1} parent=11 // pred_region
          %153 = vsyncadd [#allocation3], 0
          %s154 = smul.addr %s23, 8
          %s155 = scalar_lea.hbm %s0, %s154
          %s157 = sshll.u32 %s155, 4
          %s158 = int_to_ptr.hbm [resolvable:$true] %s157
          %s159 = sshll.u32 [#allocation2], 4
          %s160 = int_to_ptr.vmem [resolvable:$true] %s159
          %162 = dma.hbm_to_vmem [thread:$0]  %s158, 128, %s160, [#allocation3]
        $region16: #{tpu_custom_call.1} parent=11 // pred_fallthru
          _
        // Predicated region
        $region17: #{tpu_custom_call.1} parent=11 // pred_check
          %p163 = pneg %p78
        $region18: #{tpu_custom_call.1} parent=11 // pred_check_branch
          %165 = sbr.rel (%p163) target = $region20
        $region19: #{tpu_custom_call.1} parent=11 // pred_region
          %167 = vsyncadd [#allocation6], 0
          %s168 = smul.addr %s23, 8
          %s169 = scalar_lea.hbm %s1, %s168
          %s171 = sshll.u32 %s169, 4
          %s172 = int_to_ptr.hbm [resolvable:$true] %s171
          %s173 = sshll.u32 [#allocation5], 4
          %s174 = int_to_ptr.vmem [resolvable:$true] %s173
          %176 = dma.hbm_to_vmem [thread:$0]  %s172, 128, %s174, [#allocation6]
        $region20: #{tpu_custom_call.1} parent=11 // pred_fallthru
          _
      $region12: #{tpu_custom_call.1} parent=5 // pred_fallthru
        _
      %p177 = scmp.lt.s32.totalorder %s14, 2
      // Predicated region
      $region21: #{tpu_custom_call.1} parent=5 // pred_check
        %p178 = pneg %p177
      $region22: #{tpu_custom_call.1} parent=5 // pred_check_branch
        %180 = sbr.rel (%p178) target = $region24
      $region23: #{tpu_custom_call.1} parent=5 // pred_region
        // Predicated region
        $region25: #{tpu_custom_call.1} parent=23 // pred_check
          %p181 = pneg %p100
        $region26: #{tpu_custom_call.1} parent=23 // pred_check_branch
          %183 = sbr.rel (%p181) target = $region28
        $region27: #{tpu_custom_call.1} parent=23 // pred_region
          %s184 = sand.u32 %s14, 1
          %s185 = scalar_lea.sflag [#allocation3], %s184
          %s186 = sand.u32 %s90, 1
          %s187 = smul.addr %s186, 8
          %s188 = scalar_lea.vmem [#allocation7], %s187
          %190 = vsyncadd %s185, 0
          %s191 = sadd.s32 %s21, %s22
          %s192 = smul.addr %s191, 8
          %s193 = scalar_lea.hbm %s2, %s192
          %s195 = sshll.u32 %s193, 4
          %s196 = int_to_ptr.hbm [resolvable:$true] %s195
          %s197 = sshll.u32 %s188, 4
          %s198 = int_to_ptr.vmem [resolvable:$true] %s197
          %200 = dma.hbm_to_vmem [thread:$0]  %s196, 128, %s198, %s185
        $region28: #{tpu_custom_call.1} parent=23 // pred_fallthru
          _
      $region24: #{tpu_custom_call.1} parent=5 // pred_fallthru
        _
      %p201 = scmp.le.s32.totalorder 1, %s14
      %p202 = scmp.lt.s32.totalorder %s14, 3
      %p203 = pnand %p201, %p202
      %p204 = pneg %p203
      // Predicated region
      $region29: #{tpu_custom_call.1} parent=5 // pred_check
        _
      $region30: #{tpu_custom_call.1} parent=5 // pred_check_branch
        %206 = sbr.rel (%p203) target = $region32
      $region31: #{tpu_custom_call.1} parent=5 // pred_region
        %s207 = ssub.s32 %s14, 1
        // Predicated region
        $region33: #{tpu_custom_call.1} parent=31 // pred_check
          %p208 = pneg %p52
        $region34: #{tpu_custom_call.1} parent=31 // pred_check_branch
          %210 = sbr.rel (%p208) target = $region36
        $region35: #{tpu_custom_call.1} parent=31 // pred_region
          %212 = dma.done [#allocation3], 128
        $region36: #{tpu_custom_call.1} parent=31 // pred_fallthru
          _
        // Predicated region
        $region37: #{tpu_custom_call.1} parent=31 // pred_check
          %p213 = pneg %p78
        $region38: #{tpu_custom_call.1} parent=31 // pred_check_branch
          %215 = sbr.rel (%p213) target = $region40
        $region39: #{tpu_custom_call.1} parent=31 // pred_region
          %217 = dma.done [#allocation6], 128
        $region40: #{tpu_custom_call.1} parent=31 // pred_fallthru
          _
        %s218 = sand.u32 %s19, 1
        %s219 = scalar_lea.sflag [#allocation3], %s218
        %s220 = sand.u32 %s93, 1
        %s221 = smul.addr %s220, 8
        %s222 = scalar_lea.vmem [#allocation7], %s221
        // Predicated region
        $region41: #{tpu_custom_call.1} parent=31 // pred_check
          %p223 = pneg %p106
        $region42: #{tpu_custom_call.1} parent=31 // pred_check_branch
          %225 = sbr.rel (%p223) target = $region44
        $region43: #{tpu_custom_call.1} parent=31 // pred_region
          %227 = dma.done %s219, 128
        $region44: #{tpu_custom_call.1} parent=31 // pred_fallthru
          _
        %p228 = pneg %p52
        %p229 = pneg %p49
        %p230 = pneg %p78
        %p231 = pneg %p75
        %s232 = sand.u32 %s19, 1
        %s233 = scalar_lea.sflag [#allocation3], %s232
        %s234 = sand.u32 %s93, 1
        %s235 = smul.addr %s234, 8
        %s236 = scalar_lea.vmem [#allocation7], %s235
        %p237 = pneg %p106
        %p238 = pneg %p103
        %p239 = pneg %p134
        %p240 = pneg %p131
        %s241 = sand.u32 %s121, 1
        %s242 = scalar_lea.sflag [#allocation4], %s241
        %s243 = sand.u32 %s121, 1
        %s244 = smul.addr %s243, 8
        %s245 = scalar_lea.vmem [#allocation8], %s244
        %v246 = vld [vmem:[%s222] sm:$0xff]
        %247 = vrot.lane.b32.xlu0 %v246, 16
        %v248 = vpop.permute.xlu0 %247
        %249 = vrot.lane.b32.xlu0 %v246, 112
        %v250 = vpop.permute.xlu0 %249
        %v251 = vlaneseq
        %v252 = vand.u32 %v251, 127
        %vm253 = vcmp.lt.s32.totalorder %v252, 0
        %v254 = vsub.s32 0, %v252
        %v255 = vsel %vm253, %v254, %v252
        %v256 = vshrl.u32 %v255, 5
        %v257 = vand.u32 %v255, 31
        %v258 = vsub.s32 0, %v257
        %v259 = vsel %vm253, %v258, %v257
        %vm260 = vcmp.ne.s32.totalorder %v259, 0
        %vm261 = vcmp.lt.s32.totalorder %v259, 0
        %vm262 = vmand %vm261, %vm260
        %v263 = vadd.s32 %v259, 32
        %v264 = vsel %vm262, %v263, %v259
        %vm265 = vcmp.lt.s32.totalorder %v264, 16
        %v266 = vsel %vm265, %v250, %v248
        %v267 = vld [vmem:[#allocation2] sm:$0xff]
        %v268 = vmul.f32 %v246, %v267
        %v269 = vld [vmem:[#allocation5] sm:$0xff]
        %v270 = vmul.f32 %v266, %v269
        %v271 = vadd.f32 %v268, %v270
        %272 = vst [vmem:[%s245] sm:$0xff] %v271
        %s273 = sand.u32 %s121, 1
        %s274 = scalar_lea.sflag [#allocation4], %s273
        %s275 = sand.u32 %s121, 1
        %s276 = smul.addr %s275, 8
        %s277 = scalar_lea.vmem [#allocation8], %s276
        // Predicated region
        $region45: #{tpu_custom_call.1} parent=31 // pred_check
          %p278 = pneg %p131
        $region46: #{tpu_custom_call.1} parent=31 // pred_check_branch
          %280 = sbr.rel (%p278) target = $region48
        $region47: #{tpu_custom_call.1} parent=31 // pred_region
          %282 = vsyncadd %s274, 0
          %s283 = sadd.s32 %s23, %s24
          %s284 = smul.addr %s283, 8
          %s285 = scalar_lea.hbm %s3, %s284
          %s287 = sshll.u32 %s277, 4
          %s288 = int_to_ptr.vmem [resolvable:$true] %s287
          %s289 = sshll.u32 %s285, 4
          %s290 = int_to_ptr.hbm [resolvable:$true] %s289
          %292 = dma.vmem_to_hbm [thread:$0]  %s288, 128, %s290, %s274
        $region48: #{tpu_custom_call.1} parent=31 // pred_fallthru
          _
      $region32: #{tpu_custom_call.1} parent=5 // pred_fallthru
        _
      %p293 = scmp.le.s32.totalorder 2, %s14
      // Predicated region
      $region49: #{tpu_custom_call.1} parent=5 // pred_check
        %p294 = pneg %p293
      $region50: #{tpu_custom_call.1} parent=5 // pred_check_branch
        %296 = sbr.rel (%p294) target = $region52
      $region51: #{tpu_custom_call.1} parent=5 // pred_region
        %s297 = ssub.s32 %s14, 2
        // Predicated region
        $region53: #{tpu_custom_call.1} parent=51 // pred_check
          %p298 = pneg %p137
        $region54: #{tpu_custom_call.1} parent=51 // pred_check_branch
          %300 = sbr.rel (%p298) target = $region56
        $region55: #{tpu_custom_call.1} parent=51 // pred_region
          %s301 = sand.u32 %s122, 1
          %s302 = scalar_lea.sflag [#allocation4], %s301
          %s303 = sand.u32 %s122, 1
          %s304 = smul.addr %s303, 8
          %s305 = scalar_lea.vmem [#allocation8], %s304
          %307 = dma.done %s302, 128
        $region56: #{tpu_custom_call.1} parent=51 // pred_fallthru
          _
      $region52: #{tpu_custom_call.1} parent=5 // pred_fallthru
        _
    $region6: #{tpu_custom_call.1} parent=1 // loop_footer
      %s18 = sadd.s32 1, %s14
    $region7: #{tpu_custom_call.1} parent=1 // loop_footer_branch
      %13 = sbr.rel target = $region3
    $region8: #{tpu_custom_call.1} parent=1 // loop_exit
      _
    %308 = vsyncpa [#allocation3], 1
    %s309 = scalar_lea.sflag [#allocation3], 1
    %310 = vsyncpa %s309, 1
    %311 = vsyncpa [#allocation6], 1
    %312 = vsyncpa [#allocation4], 1
    %s313 = scalar_lea.sflag [#allocation4], 1
    %314 = vsyncpa %s313, 1

</llo_original>
